<compile_context>
chip_gen: v6e
topology: v6e:2x2x1
jax: 0.10.0
libtpu: 0.0.40
codegen_flags: <defaults>
</compile_context>

<pallas_src>
import functools
import math

import jax
import jax.numpy as jnp
import numpy as np
from jax.experimental import pallas as pl
from jax.experimental.pallas import tpu as pltpu


def _sinusoid_table(n_position: int, d_hid: int) -> jnp.ndarray:
    """Same table as PositionalEncoding._get_sinusoid_encoding_table (unused in forward)."""
    pos = np.arange(n_position)[:, None].astype(np.float64)
    hid = np.arange(d_hid)[None, :]
    angle = pos / np.power(10000.0, 2.0 * (hid // 2) / d_hid)
    table = np.zeros((n_position, d_hid), dtype=np.float64)
    table[:, 0::2] = np.sin(angle[:, 0::2])
    table[:, 1::2] = np.cos(angle[:, 1::2])
    return jnp.asarray(table[None, :, :], dtype=jnp.float32)


def _dec_emb_kernel(x_ref, w_ref, a1_ref, a2_ref, p_ref, o_ref):
    # x_ref : (tm_p, k*V) lane-packed rows (f32)
    # w_ref : (k*V, k*D) block-diagonal weight (k copies of W on the diagonal)
    # a1_ref: (k*D, k)   block-diagonal column-averaging matrix (1/D entries)
    # a2_ref: (k, k*D)   block-diagonal broadcast matrix (1 entries)
    # p_ref : (3, k*D)   = [bias; gamma; beta], each tiled k times
    x = x_ref[...]
    # Linear: k row-embeddings per packed row, one dense MXU matmul.
    h = jnp.dot(x, w_ref[...], preferred_element_type=jnp.float32) + p_ref[0:1, :]
    # Dropout: eval-mode identity.
    # LayerNorm (eps=1e-6, biased variance, matching torch), reduced strictly over each
    # original D-feature group via the factored averaging matrices (no in-kernel relayout).
    gmean = jnp.dot(h, a1_ref[...], preferred_element_type=jnp.float32)          # (tm, k)
    mean = jnp.dot(gmean, a2_ref[...], preferred_element_type=jnp.float32)       # (tm, k*D)
    c = h - mean
    gvar = jnp.dot(c * c, a1_ref[...], preferred_element_type=jnp.float32)       # (tm, k)
    rstd = jnp.dot(jax.lax.rsqrt(gvar + 1e-6), a2_ref[...],
                   preferred_element_type=jnp.float32)                           # (tm, k*D)
    y = c * rstd
    o_ref[...] = (y * p_ref[1:2, :] + p_ref[2:3, :]).astype(o_ref.dtype)


def _lcm(a: int, b: int) -> int:
    return a * b // math.gcd(a, b)


def _pack_factor(v: int, d: int, lane: int = 128) -> int:
    """Rows folded per packed row so both k*V and k*D are multiples of 128."""
    kv = lane // math.gcd(v, lane)
    kd = lane // math.gcd(d, lane)
    return _lcm(kv, kd)


def _pick_row_tile(m_p: int, target_p: int) -> int:
    """Fixed large tile (multiple of 8), >=2 (usually >=4) grid steps when possible."""
    target_p = max(8, (target_p // 8) * 8)
    if m_p <= 16:
        return m_p                        # too small to split into two >=8-row tiles
    steps = 4 if m_p >= 32 else 2         # prefer >=4 steps: both v7x TCs + pipelining
    tile = min(target_p, max(8, ((-(-m_p // steps)) + 7) // 8 * 8))
    if tile >= m_p:                       # safety: always leave >=2 grid steps here
        tile = max(8, ((m_p // 2) // 8) * 8)
    return tile


@functools.partial(jax.jit, static_argnames=("target_block_rows",))
def decoder_embedding(trg_seq, w, b, gamma, beta, *, target_block_rows=65536):
    """trg_seq: (B, L, V) f32 -> (B, L, D) f32. w is stored pre-transposed as (V, D)."""
    B, L, V = trg_seq.shape
    D = w.shape[1]
    M = B * L

    k = _pack_factor(V, D)               # e.g. V=16, D=32 -> k=8 -> 128 / 256 lanes
    KP, NP = k * V, k * D

    # Pad only to a multiple of k (needed for the free lane-packing reshape). The grid uses
    # a masked tail block, so no further host-side pad/copy is required.
    M_pad = -(-M // k) * k
    x2d = trg_seq.reshape(M, V)
    if M_pad != M:
        x2d = jnp.pad(x2d, ((0, M_pad - M), (0, 0)))
    M_p = M_pad // k
    x_packed = x2d.reshape(M_p, KP)       # free: same row-major bytes

    # Block-diagonal weight; factored block-diagonal averaging matrices; fused params.
    w_block = jnp.kron(jnp.eye(k, dtype=jnp.float32), w.astype(jnp.float32))      # (KP, NP)
    a1 = jnp.kron(jnp.eye(k, dtype=jnp.float32),
                  jnp.full((D, 1), 1.0 / D, dtype=jnp.float32))                   # (NP, k)
    a2 = jnp.kron(jnp.eye(k, dtype=jnp.float32),
                  jnp.ones((1, D), dtype=jnp.float32))                            # (k, NP)
    params = jnp.stack(
        [jnp.tile(b.reshape(-1).astype(jnp.float32), k),
         jnp.tile(gamma.reshape(-1).astype(jnp.float32), k),
         jnp.tile(beta.reshape(-1).astype(jnp.float32), k)], axis=0)              # (3, NP)

    # Tile sizing: big tiles amortize the ~0.35us per-step overhead; cap so the
    # double-buffered working set fits a v7x-safe VMEM limit (<= 48 MiB scoped).
    bytes_per_row = 4 * (KP + NP)
    const_bytes = 4 * (KP * NP + NP * k + k * NP + 3 * NP)
    vmem_cap = 48 * 1024 * 1024
    max_tile = max(8, (((vmem_cap - 8 * 1024 * 1024) // 2 - const_bytes)
                       // bytes_per_row) // 8 * 8)
    target_p = min(max(8, target_block_rows // k), max_tile)
    tm_p = _pick_row_tile(M_p, target_p)
    grid = (pl.cdiv(M_p, tm_p),)

    vmem_limit = min(vmem_cap,
                     max(32 * 1024 * 1024,
                         2 * (tm_p * bytes_per_row + const_bytes) + 8 * 1024 * 1024))

    cost = pl.CostEstimate(
        flops=2 * M_p * KP * NP + 6 * M_p * NP * k,
        transcendentals=M_p * k,
        bytes_accessed=4 * (M_p * KP + M_p * NP + KP * NP + 2 * NP * k + 3 * NP),
    )

    out_packed = pl.pallas_call(
        _dec_emb_kernel,
        out_shape=jax.ShapeDtypeStruct((M_p, NP), jnp.float32),
        grid_spec=pltpu.PrefetchScalarGridSpec(
            num_scalar_prefetch=0,
            grid=grid,
            in_specs=[
                pl.BlockSpec((tm_p, KP), lambda i: (i, 0)),   # packed activations (tiled)
                pl.BlockSpec((KP, NP), lambda i: (0, 0)),     # block-diag weight (resident)
                pl.BlockSpec((NP, k), lambda i: (0, 0)),      # factored averaging (columns)
                pl.BlockSpec((k, NP), lambda i: (0, 0)),      # factored broadcast (rows)
                pl.BlockSpec((3, NP), lambda i: (0, 0)),      # fused bias / gamma / beta
            ],
            out_specs=pl.BlockSpec((tm_p, NP), lambda i: (i, 0)),
        ),
        compiler_params=pltpu.CompilerParams(
            dimension_semantics=("parallel",),
            vmem_limit_bytes=vmem_limit,
        ),
        cost_estimate=cost,
    )(x_packed, w_block, a1, a2, params)

    out2d = out_packed.reshape(M_pad, D)[:M]                  # free unpack (+drop tiny pad)
    return out2d.reshape(B, L, D)


def _reference(trg_seq, w, b, gamma, beta):
    h = jnp.einsum("blv,vd->bld", trg_seq, w) + b
    mean = jnp.mean(h, axis=-1, keepdims=True)
    var = jnp.mean((h - mean) ** 2, axis=-1, keepdims=True)
    y = (h - mean) / jnp.sqrt(var + 1e-6)
    return y * gamma + beta


if __name__ == "__main__":
    # Module hyperparameters (small, consistent with the forward pass).
    n_trg_vocab = 16   # V : input feature size of the Linear
    d_word_vec = 32    # D : output of Linear
    d_model = 32       # must equal d_word_vec for LayerNorm to apply
    n_position = 64
    dropout_p = 0.1    # eval mode -> identity

    key = jax.random.PRNGKey(0)
    k_x, k_w, k_b, k_g, k_beta, k_x2 = jax.random.split(key, 6)

    # Deterministic parameter init (synthetic, no checkpoint).
    w = jax.random.normal(k_w, (n_trg_vocab, d_word_vec), dtype=jnp.float32) * 0.1  # W^T (V, D)
    b = jax.random.normal(k_b, (d_word_vec,), dtype=jnp.float32) * 0.1
    gamma = jnp.ones((d_model,), dtype=jnp.float32) \
        + 0.05 * jax.random.normal(k_g, (d_model,), dtype=jnp.float32)
    beta = 0.05 * jax.random.normal(k_beta, (d_model,), dtype=jnp.float32)

    # Built for completeness; not used in forward (matches the PyTorch module).
    _pos_table = _sinusoid_table(n_position, d_word_vec)

    # Main (small) check.
    B, L = 2, 8
    trg_seq = jax.random.normal(k_x, (B, L, n_trg_vocab), dtype=jnp.float32)
    out = jax.block_until_ready(decoder_embedding(trg_seq, w, b, gamma, beta))
    ref = _reference(trg_seq, w, b, gamma, beta)
    np.testing.assert_allclose(np.asarray(out), np.asarray(ref), rtol=1e-5, atol=1e-5)

    # Second check: exercises the pl.cdiv grid with a masked tail block (M_p % tile != 0).
    B2, L2 = 4, 100
    trg_seq2 = jax.random.normal(k_x2, (B2, L2, n_trg_vocab), dtype=jnp.float32)
    out2 = jax.block_until_ready(decoder_embedding(trg_seq2, w, b, gamma, beta))
    ref2 = _reference(trg_seq2, w, b, gamma, beta)
    np.testing.assert_allclose(np.asarray(out2), np.asarray(ref2), rtol=1e-5, atol=1e-5)

    print("KERNEL_OK")
</pallas_src>

<mosaic_0001>
module attributes {stable_mosaic.version = 11 : i64} {
  func.func @_dec_emb_kernel(%arg0: i32, %arg1: memref<2x128xf32, #tpu.memory_space<vmem>>, %arg2: memref<128x256xf32, #tpu.memory_space<vmem>>, %arg3: memref<256x8xf32, #tpu.memory_space<vmem>>, %arg4: memref<8x256xf32, #tpu.memory_space<vmem>>, %arg5: memref<3x256xf32, #tpu.memory_space<vmem>>, %arg6: memref<2x256xf32, #tpu.memory_space<vmem>>) attributes {dimension_semantics = [#tpu.dimension_semantics<parallel>], iteration_bounds = array<i64: 1>, scalar_prefetch = 0 : i64, scratch_operands = 0 : i64, tpu.core_type = #tpu.core_type<tc>, window_params = [{transform_indices = @transform_0, window_bounds = array<i64: 2, 128>}, {pipeline_mode = #tpu.pipeline_mode<synchronous>, transform_indices = @transform_1, window_bounds = array<i64: 128, 256>}, {pipeline_mode = #tpu.pipeline_mode<synchronous>, transform_indices = @transform_2, window_bounds = array<i64: 256, 8>}, {pipeline_mode = #tpu.pipeline_mode<synchronous>, transform_indices = @transform_3, window_bounds = array<i64: 8, 256>}, {pipeline_mode = #tpu.pipeline_mode<synchronous>, transform_indices = @transform_4, window_bounds = array<i64: 3, 256>}, {transform_indices = @transform_5, window_bounds = array<i64: 2, 256>}]} {
    %c0 = arith.constant 0 : index
    %c0_0 = arith.constant 0 : index
    %0 = vector.load %arg1[%c0, %c0_0] : memref<2x128xf32, #tpu.memory_space<vmem>>, vector<2x128xf32>
    %c0_1 = arith.constant 0 : index
    %c0_2 = arith.constant 0 : index
    %1 = vector.load %arg2[%c0_1, %c0_2] : memref<128x256xf32, #tpu.memory_space<vmem>>, vector<128x256xf32>
    %cst = arith.constant dense<0.000000e+00> : vector<2x256xf32>
    %2 = tpu.matmul %0, %1, %cst {dimension_numbers = #tpu.dot_dimension_numbers<[1], [0], [0], [1], [0, 0, 1, 1], [], []>} : vector<2x128xf32>, vector<128x256xf32>, vector<2x256xf32> -> vector<2x256xf32>
    %c0_3 = arith.constant 0 : index
    %c0_4 = arith.constant 0 : index
    %3 = vector.load %arg5[%c0_3, %c0_4] : memref<3x256xf32, #tpu.memory_space<vmem>>, vector<1x256xf32>
    %4 = vector.broadcast %3 : vector<1x256xf32> to vector<2x256xf32>
    %5 = arith.addf %2, %4 : vector<2x256xf32>
    %c0_5 = arith.constant 0 : index
    %c0_6 = arith.constant 0 : index
    %6 = vector.load %arg3[%c0_5, %c0_6] : memref<256x8xf32, #tpu.memory_space<vmem>>, vector<256x8xf32>
    %cst_7 = arith.constant dense<0.000000e+00> : vector<2x8xf32>
    %7 = tpu.matmul %5, %6, %cst_7 {dimension_numbers = #tpu.dot_dimension_numbers<[1], [0], [0], [1], [0, 0, 1, 1], [], []>} : vector<2x256xf32>, vector<256x8xf32>, vector<2x8xf32> -> vector<2x8xf32>
    %c0_8 = arith.constant 0 : index
    %c0_9 = arith.constant 0 : index
    %8 = vector.load %arg4[%c0_8, %c0_9] : memref<8x256xf32, #tpu.memory_space<vmem>>, vector<8x256xf32>
    %cst_10 = arith.constant dense<0.000000e+00> : vector<2x256xf32>
    %9 = tpu.matmul %7, %8, %cst_10 {dimension_numbers = #tpu.dot_dimension_numbers<[1], [0], [0], [1], [0, 0, 1, 1], [], []>} : vector<2x8xf32>, vector<8x256xf32>, vector<2x256xf32> -> vector<2x256xf32>
    %10 = arith.subf %5, %9 : vector<2x256xf32>
    %11 = arith.mulf %10, %10 : vector<2x256xf32>
    %c0_11 = arith.constant 0 : index
    %c0_12 = arith.constant 0 : index
    %12 = vector.load %arg3[%c0_11, %c0_12] : memref<256x8xf32, #tpu.memory_space<vmem>>, vector<256x8xf32>
    %cst_13 = arith.constant dense<0.000000e+00> : vector<2x8xf32>
    %13 = tpu.matmul %11, %12, %cst_13 {dimension_numbers = #tpu.dot_dimension_numbers<[1], [0], [0], [1], [0, 0, 1, 1], [], []>} : vector<2x256xf32>, vector<256x8xf32>, vector<2x8xf32> -> vector<2x8xf32>
    %cst_14 = arith.constant 9.99999997E-7 : f32
    %14 = vector.broadcast %cst_14 : f32 to vector<2x8xf32>
    %15 = arith.addf %13, %14 : vector<2x8xf32>
    %16 = math.rsqrt %15 : vector<2x8xf32>
    %c0_15 = arith.constant 0 : index
    %c0_16 = arith.constant 0 : index
    %17 = vector.load %arg4[%c0_15, %c0_16] : memref<8x256xf32, #tpu.memory_space<vmem>>, vector<8x256xf32>
    %cst_17 = arith.constant dense<0.000000e+00> : vector<2x256xf32>
    %18 = tpu.matmul %16, %17, %cst_17 {dimension_numbers = #tpu.dot_dimension_numbers<[1], [0], [0], [1], [0, 0, 1, 1], [], []>} : vector<2x8xf32>, vector<8x256xf32>, vector<2x256xf32> -> vector<2x256xf32>
    %19 = arith.mulf %10, %18 : vector<2x256xf32>
    %c1 = arith.constant 1 : index
    %c0_18 = arith.constant 0 : index
    %20 = vector.load %arg5[%c1, %c0_18] : memref<3x256xf32, #tpu.memory_space<vmem>>, vector<1x256xf32>
    %21 = vector.broadcast %20 : vector<1x256xf32> to vector<2x256xf32>
    %22 = arith.mulf %19, %21 : vector<2x256xf32>
    %c2 = arith.constant 2 : index
    %c0_19 = arith.constant 0 : index
    %23 = vector.load %arg5[%c2, %c0_19] : memref<3x256xf32, #tpu.memory_space<vmem>>, vector<1x256xf32>
    %24 = vector.broadcast %23 : vector<1x256xf32> to vector<2x256xf32>
    %25 = arith.addf %22, %24 : vector<2x256xf32>
    %c0_20 = arith.constant 0 : index
    %c0_21 = arith.constant 0 : index
    %26 = vector.load %arg6[%c0_20, %c0_21] : memref<2x256xf32, #tpu.memory_space<vmem>>, vector<2x256xf32>
    tpu.vector_store %arg6[%c0_20, %c0_21], %25 {strides = array<i32>} : memref<2x256xf32, #tpu.memory_space<vmem>>, vector<2x256xf32>,
    return
  }
  func.func @transform_0(%arg0: i32) -> (i32, i32) {
    %c0_i32 = arith.constant 0 : i32
    %c0_i32_0 = arith.constant 0 : i32
    return %arg0, %c0_i32 : i32, i32
  }
  func.func @transform_1(%arg0: i32) -> (i32, i32) {
    %c0_i32 = arith.constant 0 : i32
    %c0_i32_0 = arith.constant 0 : i32
    %c0_i32_1 = arith.constant 0 : i32
    return %c0_i32, %c0_i32_0 : i32, i32
  }
  func.func @transform_2(%arg0: i32) -> (i32, i32) {
    %c0_i32 = arith.constant 0 : i32
    %c0_i32_0 = arith.constant 0 : i32
    %c0_i32_1 = arith.constant 0 : i32
    return %c0_i32, %c0_i32_0 : i32, i32
  }
  func.func @transform_3(%arg0: i32) -> (i32, i32) {
    %c0_i32 = arith.constant 0 : i32
    %c0_i32_0 = arith.constant 0 : i32
    %c0_i32_1 = arith.constant 0 : i32
    return %c0_i32, %c0_i32_0 : i32, i32
  }
  func.func @transform_4(%arg0: i32) -> (i32, i32) {
    %c0_i32 = arith.constant 0 : i32
    %c0_i32_0 = arith.constant 0 : i32
    %c0_i32_1 = arith.constant 0 : i32
    return %c0_i32, %c0_i32_0 : i32, i32
  }
  func.func @transform_5(%arg0: i32) -> (i32, i32) {
    %c0_i32 = arith.constant 0 : i32
    %c0_i32_0 = arith.constant 0 : i32
    return %arg0, %c0_i32 : i32, i32
  }
}

</mosaic_0001>

<llo_original>
// kernel: tile.18
$region0: #{tile.18}
  #allocation0 [shape = 's32[1]{0}', space=sflag, size = 0x4, scoped, tag = 'scoped memory for tile.18']
  %s0 = inlined_call_operand.vmem [shape: f32[32], index: 0, kind: input, shape index: {}]
  %s1 = inlined_call_operand.vmem [shape: f32[8,32], index: 1, kind: output, shape index: {}]
  // Predicated region
  $region2: #{tile.18} parent=0 // pred_check
    _
  $region3: #{tile.18} parent=0 // pred_check_branch
    %3 = sbr.rel (0) target = $region5
  $region4: #{tile.18} parent=0 // pred_region
    _
  $region5: #{tile.18} parent=0 // pred_fallthru
    _
  %v4 = vld [vmem:[%s0] ss:$0 sm:$0xff]
  %5 = vst [vmem:[%s1] sm:$0xff] %v4

// kernel: tile.27
$region0: #{tile.27}
  %s0 = inlined_call_operand.vmem [shape: f32[8,32], index: 0, kind: input, shape index: {}]
  %s1 = inlined_call_operand.vmem [shape: f32[1,256], index: 1, kind: output, shape index: {}]
  $region1: #{tile.27} parent=0
    #allocation0 [shape = 'u8[8192]{0}', space=vmem, size = 0x2000, scoped, tag = 'scoped mem for output reshape']
    %s2 = smov 3
    %v3 = vld [vmem:[%s0] ss:$4 sm:%s2]
    %vm4 = vcmask 261120
    %5 = vst.msk [vmem:[#allocation0] ss:$8 sm:$0x3] %vm4, %v3
    %s6 = scalar_lea.vmem %s0, 3
    %s7 = smov 3
    %v8 = vld [vmem:[%s6] ss:$4 sm:%s7]
    %9 = vrot.lane.b32.xlu0 %v8, 96
    %v10 = vpop.permute.xlu0 %9
    %vm11 = vcmask 1048320
    %12 = vst.msk [vmem:[#allocation0] ss:$8 sm:$0x3] %vm11, %v10
    %s13 = scalar_lea.vmem %s0, 2
    %s14 = smov 3
    %v15 = vld [vmem:[%s13] ss:$4 sm:%s14]
    %16 = vrot.lane.b32.xlu0 %v15, 64
    %v17 = vpop.permute.xlu0 %16
    %vm18 = vcmask 785920
    %19 = vst.msk [vmem:[#allocation0] ss:$8 sm:$0x3] %vm18, %v17
    %s20 = scalar_lea.vmem %s0, 1
    %s21 = smov 3
    %v22 = vld [vmem:[%s20] ss:$4 sm:%s21]
    %23 = vrot.lane.b32.xlu0 %v22, 32
    %v24 = vpop.permute.xlu0 %23
    %vm25 = vcmask 523520
    %26 = vst.msk [vmem:[#allocation0] ss:$8 sm:$0x3] %vm25, %v24
    %s28 = sshll.u32 1, 1
    %s29 = ssub.s32 %s28, 1
    %v31 = vld [vmem:[#allocation0] sm:%s29]
    %s32 = sshll.u32 1, 1
    %s33 = ssub.s32 %s32, 1
    %34 = vst [vmem:[%s1] sm:%s33] %v31
    %s35 = scalar_lea.vmem [#allocation0], 8
    %v36 = vld [vmem:[%s35] sm:%s29]
    %s37 = sshll.u32 1, 1
    %s38 = ssub.s32 %s37, 1
    %s39 = scalar_lea.vmem %s1, 1
    %40 = vst [vmem:[%s39] sm:%s38] %v36

// kernel: decoder_embedding.1
$region0: #{decoder_embedding.1}
  #allocation0 [shape = 'u32[]', space=smem, size = 0x4, offset = 0x4, fixed_abs, tag = 'smem constant byte address 0x4 - core index']
  #allocation1 [shape = 'u32[144,128]{1,0:T(1,128)}', space=vmem, size = 0x12000, scoped, tag = 'internal scratch']
  %s0 = inlined_call_operand.vmem [shape: f32[2,128], index: 0, kind: input, shape index: {}]
  %s1 = inlined_call_operand.vmem [shape: f32[128,256], index: 1, kind: input, shape index: {}]
  %s2 = inlined_call_operand.vmem [shape: f32[256,8], index: 2, kind: input, shape index: {}]
  %s3 = inlined_call_operand.vmem [shape: f32[8,256], index: 3, kind: input, shape index: {}]
  %s4 = inlined_call_operand.vmem [shape: f32[3,256], index: 4, kind: input, shape index: {}]
  %s5 = inlined_call_operand.vmem [shape: f32[2,256], index: 5, kind: output, shape index: {}]
  %s6 = sld [smem:[#allocation0]]
  $region30: #{decoder_embedding.1} parent=0
    _
  %s8 = ssub.s32 1, %s6
  %s9 = scalar_select 0, %s8, %s6
  // Predicated region
  $region2: #{decoder_embedding.1} parent=0 // pred_check
    _
  $region3: #{decoder_embedding.1} parent=0 // pred_check_branch
    %11 = sbr.rel (0) target = $region5
  $region4: #{decoder_embedding.1} parent=0 // pred_region
    _
  $region5: #{decoder_embedding.1} parent=0 // pred_fallthru
    _
  // Predicated region
  $region6: #{decoder_embedding.1} parent=0 // pred_check
    _
  $region7: #{decoder_embedding.1} parent=0 // pred_check_branch
    %13 = sbr.rel (0) target = $region9
  $region8: #{decoder_embedding.1} parent=0 // pred_region
    _
  $region9: #{decoder_embedding.1} parent=0 // pred_fallthru
    _
  // Predicated region
  $region10: #{decoder_embedding.1} parent=0 // pred_check
    _
  $region11: #{decoder_embedding.1} parent=0 // pred_check_branch
    %15 = sbr.rel (0) target = $region13
  $region12: #{decoder_embedding.1} parent=0 // pred_region
    _
  $region13: #{decoder_embedding.1} parent=0 // pred_fallthru
    _
  // Predicated region
  $region14: #{decoder_embedding.1} parent=0 // pred_check
    _
  $region15: #{decoder_embedding.1} parent=0 // pred_check_branch
    %17 = sbr.rel (0) target = $region17
  $region16: #{decoder_embedding.1} parent=0 // pred_region
    _
  $region17: #{decoder_embedding.1} parent=0 // pred_fallthru
    _
  // Predicated region
  $region18: #{decoder_embedding.1} parent=0 // pred_check
    _
  $region19: #{decoder_embedding.1} parent=0 // pred_check_branch
    %19 = sbr.rel (0) target = $region21
  $region20: #{decoder_embedding.1} parent=0 // pred_region
    _
  $region21: #{decoder_embedding.1} parent=0 // pred_fallthru
    _
  %v20 = vld [vmem:[%s0] sm:$0x3]
  %v21 = vld [vmem:[%s1] sm:$0xff]
  %v22 = vld [vmem:[%s1 + $0x8] sm:$0xff]
  %v23 = vld [vmem:[%s1 + $0x10] sm:$0xff]
  %v24 = vld [vmem:[%s1 + $0x18] sm:$0xff]
  %v25 = vld [vmem:[%s1 + $0x20] sm:$0xff]
  %v26 = vld [vmem:[%s1 + $0x28] sm:$0xff]
  %v27 = vld [vmem:[%s1 + $0x30] sm:$0xff]
  %v28 = vld [vmem:[%s1 + $0x38] sm:$0xff]
  %v29 = vld [vmem:[%s1 + $0x40] sm:$0xff]
  %v30 = vld [vmem:[%s1 + $0x48] sm:$0xff]
  %v31 = vld [vmem:[%s1 + $0x50] sm:$0xff]
  %v32 = vld [vmem:[%s1 + $0x58] sm:$0xff]
  %v33 = vld [vmem:[%s1 + $0x60] sm:$0xff]
  %v34 = vld [vmem:[%s1 + $0x68] sm:$0xff]
  %v35 = vld [vmem:[%s1 + $0x70] sm:$0xff]
  %v36 = vld [vmem:[%s1 + $0x78] sm:$0xff]
  %v37 = vld [vmem:[%s1 + $0x80] sm:$0xff]
  %v38 = vld [vmem:[%s1 + $0x88] sm:$0xff]
  %v39 = vld [vmem:[%s1 + $0x90] sm:$0xff]
  %v40 = vld [vmem:[%s1 + $0x98] sm:$0xff]
  %v41 = vld [vmem:[%s1 + $0xa0] sm:$0xff]
  %v42 = vld [vmem:[%s1 + $0xa8] sm:$0xff]
  %v43 = vld [vmem:[%s1 + $0xb0] sm:$0xff]
  %v44 = vld [vmem:[%s1 + $0xb8] sm:$0xff]
  %v45 = vld [vmem:[%s1 + $0xc0] sm:$0xff]
  %v46 = vld [vmem:[%s1 + $0xc8] sm:$0xff]
  %v47 = vld [vmem:[%s1 + $0xd0] sm:$0xff]
  %v48 = vld [vmem:[%s1 + $0xd8] sm:$0xff]
  %v49 = vld [vmem:[%s1 + $0xe0] sm:$0xff]
  %v50 = vld [vmem:[%s1 + $0xe8] sm:$0xff]
  %v51 = vld [vmem:[%s1 + $0xf0] sm:$0xff]
  %v52 = vld [vmem:[%s1 + $0xf8] sm:$0xff]
  %v53 = vld [vmem:[%s4] ss:$4 sm:$0x3]
  %v55 = vlaneseq
  %v56 = vshrl.u32 %v55, 7
  %v57 = vsub.s32 0, %v56
  %v58 = vrot.slane %v53, %v57
  %v59 = vlaneseq
  %v60 = vshrl.u32 %v59, 7
  %v61 = vsub.s32 1, %v60
  %v62 = vrot.slane %v53, %v61
  %65 = vmatprep.subr.mxu0 %v52
  %66 = vmatpush1.msra.mxu0 %v51
  %67 = vmatprep.subr.mxu0 %v50
  %68 = vmatpush1.msra.mxu0 %v49
  %69 = vmatprep.subr.mxu0 %v48
  %70 = vmatpush1.msra.mxu0 %v47
  %71 = vmatprep.subr.mxu0 %v46
  %72 = vmatpush1.msra.mxu0 %v45
  %73 = vmatprep.subr.mxu0 %v44
  %74 = vmatpush1.msra.mxu0 %v43
  %75 = vmatprep.subr.mxu0 %v42
  %76 = vmatpush1.msra.mxu0 %v41
  %77 = vmatprep.subr.mxu0 %v40
  %78 = vmatpush1.msra.mxu0 %v39
  %79 = vmatprep.subr.mxu0 %v38
  %80 = vmatpush1.msra.mxu0 %v37
  %81 = vmatprep.subr.mxu0 %v36
  %82 = vmatpush1.msra.mxu0 %v35
  %83 = vmatprep.subr.mxu0 %v34
  %84 = vmatpush1.msra.mxu0 %v33
  %85 = vmatprep.subr.mxu0 %v32
  %86 = vmatpush1.msra.mxu0 %v31
  %87 = vmatprep.subr.mxu0 %v30
  %88 = vmatpush1.msra.mxu0 %v29
  %89 = vmatprep.subr.mxu0 %v28
  %90 = vmatpush1.msra.mxu0 %v27
  %91 = vmatprep.subr.mxu0 %v26
  %92 = vmatpush1.msra.mxu0 %v25
  %93 = vmatprep.subr.mxu0 %v24
  %94 = vmatpush1.msra.mxu0 %v23
  %95 = vmatprep.subr.mxu0 %v22
  %96 = vmatpush1.msra.mxu0 %v21
  %97 = vmatprep.subr.mxu0 0.0
  %98 = vmatpush2.msra.mxu0 0.0
  %99 = vmatprep.subr.mxu0 0.0
  %100 = vmatpush2.msra.mxu0 0.0
  %101 = vmatprep.subr.mxu0 0.0
  %102 = vmatpush2.msra.mxu0 0.0
  %103 = vmatprep.subr.mxu0 0.0
  %104 = vmatpush2.msra.mxu0 0.0
  %105 = vmatprep.subr.mxu0 0.0
  %106 = vmatpush2.msra.mxu0 0.0
  %107 = vmatprep.subr.mxu0 0.0
  %108 = vmatpush2.msra.mxu0 0.0
  %109 = vmatprep.subr.mxu0 0.0
  %110 = vmatpush2.msra.mxu0 0.0
  %111 = vmatprep.subr.mxu0 0.0
  %112 = vmatpush2.msra.mxu0 0.0
  %113 = vmatprep.subr.mxu0 0.0
  %114 = vmatpush2.msra.mxu0 0.0
  %115 = vmatprep.subr.mxu0 0.0
  %116 = vmatpush2.msra.mxu0 0.0
  %117 = vmatprep.subr.mxu0 0.0
  %118 = vmatpush2.msra.mxu0 0.0
  %119 = vmatprep.subr.mxu0 0.0
  %120 = vmatpush2.msra.mxu0 0.0
  %121 = vmatprep.subr.mxu0 0.0
  %122 = vmatpush2.msra.mxu0 0.0
  %123 = vmatprep.subr.mxu0 0.0
  %124 = vmatpush2.msra.mxu0 0.0
  %125 = vmatprep.subr.mxu0 0.0
  %126 = vmatpush2.msra.mxu0 0.0
  %127 = vmatprep.subr.mxu0 0.0
  %128 = vmatpush2.msra.mxu0 0.0
  %129 = vmatprep.mubr.f32.mxu0 0.0
  %130 = vmatmul.mubr.f32.gmra.mxu0 %v20
  %v131 = vpop.f32.mrf.mxu0
  %v132 = vadd.f32 %v58, %v131
  %v133 = vpop.f32.mrf.mxu0
  %v134 = vadd.f32 %v62, %v133
  %135 = vdwg.mxu0
  %v136 = vld [vmem:[%s2] sm:$0xff]
  %v137 = vld [vmem:[%s2 + $0x8] sm:$0xff]
  %v138 = vld [vmem:[%s2 + $0x10] sm:$0xff]
  %v139 = vld [vmem:[%s2 + $0x18] sm:$0xff]
  %v140 = vld [vmem:[%s2 + $0x20] sm:$0xff]
  %v141 = vld [vmem:[%s2 + $0x28] sm:$0xff]
  %v142 = vld [vmem:[%s2 + $0x30] sm:$0xff]
  %v143 = vld [vmem:[%s2 + $0x38] sm:$0xff]
  %v144 = vld [vmem:[%s2 + $0x40] sm:$0xff]
  %v145 = vld [vmem:[%s2 + $0x48] sm:$0xff]
  %v146 = vld [vmem:[%s2 + $0x50] sm:$0xff]
  %v147 = vld [vmem:[%s2 + $0x58] sm:$0xff]
  %v148 = vld [vmem:[%s2 + $0x60] sm:$0xff]
  %v149 = vld [vmem:[%s2 + $0x68] sm:$0xff]
  %v150 = vld [vmem:[%s2 + $0x70] sm:$0xff]
  %v151 = vld [vmem:[%s2 + $0x78] sm:$0xff]
  %v152 = vld [vmem:[%s2 + $0x80] sm:$0xff]
  %v153 = vld [vmem:[%s2 + $0x88] sm:$0xff]
  %v154 = vld [vmem:[%s2 + $0x90] sm:$0xff]
  %v155 = vld [vmem:[%s2 + $0x98] sm:$0xff]
  %v156 = vld [vmem:[%s2 + $0xa0] sm:$0xff]
  %v157 = vld [vmem:[%s2 + $0xa8] sm:$0xff]
  %v158 = vld [vmem:[%s2 + $0xb0] sm:$0xff]
  %v159 = vld [vmem:[%s2 + $0xb8] sm:$0xff]
  %v160 = vld [vmem:[%s2 + $0xc0] sm:$0xff]
  %v161 = vld [vmem:[%s2 + $0xc8] sm:$0xff]
  %v162 = vld [vmem:[%s2 + $0xd0] sm:$0xff]
  %v163 = vld [vmem:[%s2 + $0xd8] sm:$0xff]
  %v164 = vld [vmem:[%s2 + $0xe0] sm:$0xff]
  %v165 = vld [vmem:[%s2 + $0xe8] sm:$0xff]
  %v166 = vld [vmem:[%s2 + $0xf0] sm:$0xff]
  %v167 = vld [vmem:[%s2 + $0xf8] sm:$0xff]
  %168 = vmatprep.subr.mxu0 0.0
  %169 = vmatpush1.msra.mxu0 %v151
  %170 = vmatprep.subr.mxu0 0.0
  %171 = vmatpush1.msra.mxu0 %v150
  %172 = vmatprep.subr.mxu0 0.0
  %173 = vmatpush1.msra.mxu0 %v149
  %174 = vmatprep.subr.mxu0 0.0
  %175 = vmatpush1.msra.mxu0 %v148
  %176 = vmatprep.subr.mxu0 0.0
  %177 = vmatpush1.msra.mxu0 %v147
  %178 = vmatprep.subr.mxu0 0.0
  %179 = vmatpush1.msra.mxu0 %v146
  %180 = vmatprep.subr.mxu0 0.0
  %181 = vmatpush1.msra.mxu0 %v145
  %182 = vmatprep.subr.mxu0 0.0
  %183 = vmatpush1.msra.mxu0 %v144
  %184 = vmatprep.subr.mxu0 0.0
  %185 = vmatpush1.msra.mxu0 %v143
  %186 = vmatprep.subr.mxu0 0.0
  %187 = vmatpush1.msra.mxu0 %v142
  %188 = vmatprep.subr.mxu0 0.0
  %189 = vmatpush1.msra.mxu0 %v141
  %190 = vmatprep.subr.mxu0 0.0
  %191 = vmatpush1.msra.mxu0 %v140
  %192 = vmatprep.subr.mxu0 0.0
  %193 = vmatpush1.msra.mxu0 %v139
  %194 = vmatprep.subr.mxu0 0.0
  %195 = vmatpush1.msra.mxu0 %v138
  %196 = vmatprep.subr.mxu0 0.0
  %197 = vmatpush1.msra.mxu0 %v137
  %198 = vmatprep.subr.mxu0 0.0
  %199 = vmatpush1.msra.mxu0 %v136
  %200 = vmatprep.subr.mxu0 0.0
  %201 = vmatpush2.msra.mxu0 %v167
  %202 = vmatprep.subr.mxu0 0.0
  %203 = vmatpush2.msra.mxu0 %v166
  %204 = vmatprep.subr.mxu0 0.0
  %205 = vmatpush2.msra.mxu0 %v165
  %206 = vmatprep.subr.mxu0 0.0
  %207 = vmatpush2.msra.mxu0 %v164
  %208 = vmatprep.subr.mxu0 0.0
  %209 = vmatpush2.msra.mxu0 %v163
  %210 = vmatprep.subr.mxu0 0.0
  %211 = vmatpush2.msra.mxu0 %v162
  %212 = vmatprep.subr.mxu0 0.0
  %213 = vmatpush2.msra.mxu0 %v161
  %214 = vmatprep.subr.mxu0 0.0
  %215 = vmatpush2.msra.mxu0 %v160
  %216 = vmatprep.subr.mxu0 0.0
  %217 = vmatpush2.msra.mxu0 %v159
  %218 = vmatprep.subr.mxu0 0.0
  %219 = vmatpush2.msra.mxu0 %v158
  %220 = vmatprep.subr.mxu0 0.0
  %221 = vmatpush2.msra.mxu0 %v157
  %222 = vmatprep.subr.mxu0 0.0
  %223 = vmatpush2.msra.mxu0 %v156
  %224 = vmatprep.subr.mxu0 0.0
  %225 = vmatpush2.msra.mxu0 %v155
  %226 = vmatprep.subr.mxu0 0.0
  %227 = vmatpush2.msra.mxu0 %v154
  %228 = vmatprep.subr.mxu0 0.0
  %229 = vmatpush2.msra.mxu0 %v153
  %230 = vmatprep.subr.mxu0 0.0
  %231 = vmatpush2.msra.mxu0 %v152
  %232 = vmatprep.mubr.f32.mxu0 %v134
  %233 = vmatmul.mubr.f32.gmra.mxu0 %v132
  %v234 = vpop.f32.mrf.mxu0
  %v235 = vadd.f32 0.0, %v234
  %v236 = vpop.f32.mrf.mxu0
  %237 = vdwg.mxu0
  %v238 = vld [vmem:[%s3] sm:$0xff]
  %v239 = vld [vmem:[%s3 + $0x8] sm:$0xff]
  %vm240 = vcmask 64512
  %v242 = vsel %vm240, %v235, 0
  %244 = vmatprep.subr.mxu0 0.0
  %245 = vmatpush1.msra.mxu0 0.0
  %246 = vmatprep.subr.mxu0 0.0
  %247 = vmatpush1.msra.mxu0 0.0
  %248 = vmatprep.subr.mxu0 0.0
  %249 = vmatpush1.msra.mxu0 0.0
  %250 = vmatprep.subr.mxu0 0.0
  %251 = vmatpush1.msra.mxu0 0.0
  %252 = vmatprep.subr.mxu0 0.0
  %253 = vmatpush1.msra.mxu0 0.0
  %254 = vmatprep.subr.mxu0 0.0
  %255 = vmatpush1.msra.mxu0 0.0
  %256 = vmatprep.subr.mxu0 0.0
  %257 = vmatpush1.msra.mxu0 0.0
  %258 = vmatprep.subr.mxu0 0.0
  %259 = vmatpush1.msra.mxu0 0.0
  %260 = vmatprep.subr.mxu0 0.0
  %261 = vmatpush1.msra.mxu0 0.0
  %262 = vmatprep.subr.mxu0 0.0
  %263 = vmatpush1.msra.mxu0 0.0
  %264 = vmatprep.subr.mxu0 0.0
  %265 = vmatpush1.msra.mxu0 0.0
  %266 = vmatprep.subr.mxu0 0.0
  %267 = vmatpush1.msra.mxu0 0.0
  %268 = vmatprep.subr.mxu0 0.0
  %269 = vmatpush1.msra.mxu0 0.0
  %270 = vmatprep.subr.mxu0 0.0
  %271 = vmatpush1.msra.mxu0 0.0
  %272 = vmatprep.subr.mxu0 0.0
  %273 = vmatpush1.msra.mxu0 0.0
  %274 = vmatprep.subr.mxu0 %v239
  %275 = vmatpush1.msra.mxu0 %v238
  %276 = vmatprep.subr.mxu0 0.0
  %277 = vmatpush2.msra.mxu0 0.0
  %278 = vmatprep.subr.mxu0 0.0
  %279 = vmatpush2.msra.mxu0 0.0
  %280 = vmatprep.subr.mxu0 0.0
  %281 = vmatpush2.msra.mxu0 0.0
  %282 = vmatprep.subr.mxu0 0.0
  %283 = vmatpush2.msra.mxu0 0.0
  %284 = vmatprep.subr.mxu0 0.0
  %285 = vmatpush2.msra.mxu0 0.0
  %286 = vmatprep.subr.mxu0 0.0
  %287 = vmatpush2.msra.mxu0 0.0
  %288 = vmatprep.subr.mxu0 0.0
  %289 = vmatpush2.msra.mxu0 0.0
  %290 = vmatprep.subr.mxu0 0.0
  %291 = vmatpush2.msra.mxu0 0.0
  %292 = vmatprep.subr.mxu0 0.0
  %293 = vmatpush2.msra.mxu0 0.0
  %294 = vmatprep.subr.mxu0 0.0
  %295 = vmatpush2.msra.mxu0 0.0
  %296 = vmatprep.subr.mxu0 0.0
  %297 = vmatpush2.msra.mxu0 0.0
  %298 = vmatprep.subr.mxu0 0.0
  %299 = vmatpush2.msra.mxu0 0.0
  %300 = vmatprep.subr.mxu0 0.0
  %301 = vmatpush2.msra.mxu0 0.0
  %302 = vmatprep.subr.mxu0 0.0
  %303 = vmatpush2.msra.mxu0 0.0
  %304 = vmatprep.subr.mxu0 0.0
  %305 = vmatpush2.msra.mxu0 0.0
  %306 = vmatprep.subr.mxu0 0.0
  %307 = vmatpush2.msra.mxu0 0.0
  %308 = vmatprep.mubr.f32.mxu0 0.0
  %309 = vmatmul.mubr.f32.gmra.mxu0 %v242
  %v310 = vpop.f32.mrf.mxu0
  %v311 = vadd.f32 0.0, %v310
  %v312 = vpop.f32.mrf.mxu0
  %v313 = vadd.f32 0.0, %v312
  %314 = vdwg.mxu0
  %v315 = vsub.f32 %v132, %v311
  %v316 = vsub.f32 %v134, %v313
  %v317 = vmul.f32 %v315, %v315
  %v318 = vmul.f32 %v316, %v316
  %319 = vmatprep.subr.mxu0 0.0
  %320 = vmatpush1.msra.mxu0 %v151
  %321 = vmatprep.subr.mxu0 0.0
  %322 = vmatpush1.msra.mxu0 %v150
  %323 = vmatprep.subr.mxu0 0.0
  %324 = vmatpush1.msra.mxu0 %v149
  %325 = vmatprep.subr.mxu0 0.0
  %326 = vmatpush1.msra.mxu0 %v148
  %327 = vmatprep.subr.mxu0 0.0
  %328 = vmatpush1.msra.mxu0 %v147
  %329 = vmatprep.subr.mxu0 0.0
  %330 = vmatpush1.msra.mxu0 %v146
  %331 = vmatprep.subr.mxu0 0.0
  %332 = vmatpush1.msra.mxu0 %v145
  %333 = vmatprep.subr.mxu0 0.0
  %334 = vmatpush1.msra.mxu0 %v144
  %335 = vmatprep.subr.mxu0 0.0
  %336 = vmatpush1.msra.mxu0 %v143
  %337 = vmatprep.subr.mxu0 0.0
  %338 = vmatpush1.msra.mxu0 %v142
  %339 = vmatprep.subr.mxu0 0.0
  %340 = vmatpush1.msra.mxu0 %v141
  %341 = vmatprep.subr.mxu0 0.0
  %342 = vmatpush1.msra.mxu0 %v140
  %343 = vmatprep.subr.mxu0 0.0
  %344 = vmatpush1.msra.mxu0 %v139
  %345 = vmatprep.subr.mxu0 0.0
  %346 = vmatpush1.msra.mxu0 %v138
  %347 = vmatprep.subr.mxu0 0.0
  %348 = vmatpush1.msra.mxu0 %v137
  %349 = vmatprep.subr.mxu0 0.0
  %350 = vmatpush1.msra.mxu0 %v136
  %351 = vmatprep.subr.mxu0 0.0
  %352 = vmatpush2.msra.mxu0 %v167
  %353 = vmatprep.subr.mxu0 0.0
  %354 = vmatpush2.msra.mxu0 %v166
  %355 = vmatprep.subr.mxu0 0.0
  %356 = vmatpush2.msra.mxu0 %v165
  %357 = vmatprep.subr.mxu0 0.0
  %358 = vmatpush2.msra.mxu0 %v164
  %359 = vmatprep.subr.mxu0 0.0
  %360 = vmatpush2.msra.mxu0 %v163
  %361 = vmatprep.subr.mxu0 0.0
  %362 = vmatpush2.msra.mxu0 %v162
  %363 = vmatprep.subr.mxu0 0.0
  %364 = vmatpush2.msra.mxu0 %v161
  %365 = vmatprep.subr.mxu0 0.0
  %366 = vmatpush2.msra.mxu0 %v160
  %367 = vmatprep.subr.mxu0 0.0
  %368 = vmatpush2.msra.mxu0 %v159
  %369 = vmatprep.subr.mxu0 0.0
  %370 = vmatpush2.msra.mxu0 %v158
  %371 = vmatprep.subr.mxu0 0.0
  %372 = vmatpush2.msra.mxu0 %v157
  %373 = vmatprep.subr.mxu0 0.0
  %374 = vmatpush2.msra.mxu0 %v156
  %375 = vmatprep.subr.mxu0 0.0
  %376 = vmatpush2.msra.mxu0 %v155
  %377 = vmatprep.subr.mxu0 0.0
  %378 = vmatpush2.msra.mxu0 %v154
  %379 = vmatprep.subr.mxu0 0.0
  %380 = vmatpush2.msra.mxu0 %v153
  %381 = vmatprep.subr.mxu0 0.0
  %382 = vmatpush2.msra.mxu0 %v152
  %383 = vmatprep.mubr.f32.mxu0 %v318
  %384 = vmatmul.mubr.f32.gmra.mxu0 %v317
  %v385 = vpop.f32.mrf.mxu0
  %v386 = vadd.f32 1e-06, %v385
  %v387 = vpop.f32.mrf.mxu0
  %388 = vdwg.mxu0
  %v389 = vrsqrt.pop %v386
  %v391 = vsel %vm240, %v389, 0
  %393 = vmatprep.subr.mxu0 0.0
  %394 = vmatpush1.msra.mxu0 0.0
  %395 = vmatprep.subr.mxu0 0.0
  %396 = vmatpush1.msra.mxu0 0.0
  %397 = vmatprep.subr.mxu0 0.0
  %398 = vmatpush1.msra.mxu0 0.0
  %399 = vmatprep.subr.mxu0 0.0
  %400 = vmatpush1.msra.mxu0 0.0
  %401 = vmatprep.subr.mxu0 0.0
  %402 = vmatpush1.msra.mxu0 0.0
  %403 = vmatprep.subr.mxu0 0.0
  %404 = vmatpush1.msra.mxu0 0.0
  %405 = vmatprep.subr.mxu0 0.0
  %406 = vmatpush1.msra.mxu0 0.0
  %407 = vmatprep.subr.mxu0 0.0
  %408 = vmatpush1.msra.mxu0 0.0
  %409 = vmatprep.subr.mxu0 0.0
  %410 = vmatpush1.msra.mxu0 0.0
  %411 = vmatprep.subr.mxu0 0.0
  %412 = vmatpush1.msra.mxu0 0.0
  %413 = vmatprep.subr.mxu0 0.0
  %414 = vmatpush1.msra.mxu0 0.0
  %415 = vmatprep.subr.mxu0 0.0
  %416 = vmatpush1.msra.mxu0 0.0
  %417 = vmatprep.subr.mxu0 0.0
  %418 = vmatpush1.msra.mxu0 0.0
  %419 = vmatprep.subr.mxu0 0.0
  %420 = vmatpush1.msra.mxu0 0.0
  %421 = vmatprep.subr.mxu0 0.0
  %422 = vmatpush1.msra.mxu0 0.0
  %423 = vmatprep.subr.mxu0 %v239
  %424 = vmatpush1.msra.mxu0 %v238
  %425 = vmatprep.subr.mxu0 0.0
  %426 = vmatpush2.msra.mxu0 0.0
  %427 = vmatprep.subr.mxu0 0.0
  %428 = vmatpush2.msra.mxu0 0.0
  %429 = vmatprep.subr.mxu0 0.0
  %430 = vmatpush2.msra.mxu0 0.0
  %431 = vmatprep.subr.mxu0 0.0
  %432 = vmatpush2.msra.mxu0 0.0
  %433 = vmatprep.subr.mxu0 0.0
  %434 = vmatpush2.msra.mxu0 0.0
  %435 = vmatprep.subr.mxu0 0.0
  %436 = vmatpush2.msra.mxu0 0.0
  %437 = vmatprep.subr.mxu0 0.0
  %438 = vmatpush2.msra.mxu0 0.0
  %439 = vmatprep.subr.mxu0 0.0
  %440 = vmatpush2.msra.mxu0 0.0
  %441 = vmatprep.subr.mxu0 0.0
  %442 = vmatpush2.msra.mxu0 0.0
  %443 = vmatprep.subr.mxu0 0.0
  %444 = vmatpush2.msra.mxu0 0.0
  %445 = vmatprep.subr.mxu0 0.0
  %446 = vmatpush2.msra.mxu0 0.0
  %447 = vmatprep.subr.mxu0 0.0
  %448 = vmatpush2.msra.mxu0 0.0
  %449 = vmatprep.subr.mxu0 0.0
  %450 = vmatpush2.msra.mxu0 0.0
  %451 = vmatprep.subr.mxu0 0.0
  %452 = vmatpush2.msra.mxu0 0.0
  %453 = vmatprep.subr.mxu0 0.0
  %454 = vmatpush2.msra.mxu0 0.0
  %455 = vmatprep.subr.mxu0 0.0
  %456 = vmatpush2.msra.mxu0 0.0
  %457 = vmatprep.mubr.f32.mxu0 0.0
  %458 = vmatmul.mubr.f32.gmra.mxu0 %v391
  %v459 = vpop.f32.mrf.mxu0
  %v460 = vadd.f32 0.0, %v459
  %v461 = vpop.f32.mrf.mxu0
  %v462 = vadd.f32 0.0, %v461
  %463 = vdwg.mxu0
  %v464 = vmul.f32 %v315, %v460
  %v465 = vmul.f32 %v316, %v462
  %s466 = scalar_lea.vmem %s4, 1
  %v467 = vld [vmem:[%s466] ss:$4 sm:$0x3]
  %v469 = vlaneseq
  %v470 = vshrl.u32 %v469, 7
  %v471 = vsub.s32 0, %v470
  %v472 = vrot.slane %v467, %v471
  %v473 = vlaneseq
  %v474 = vshrl.u32 %v473, 7
  %v475 = vsub.s32 1, %v474
  %v476 = vrot.slane %v467, %v475
  %v479 = vmul.f32 %v464, %v472
  %v480 = vmul.f32 %v465, %v476
  %s481 = scalar_lea.vmem %s4, 2
  %v482 = vld [vmem:[%s481] ss:$4 sm:$0x3]
  %v484 = vlaneseq
  %v485 = vshrl.u32 %v484, 7
  %v486 = vsub.s32 0, %v485
  %v487 = vrot.slane %v482, %v486
  %v488 = vlaneseq
  %v489 = vshrl.u32 %v488, 7
  %v490 = vsub.s32 1, %v489
  %v491 = vrot.slane %v482, %v490
  %v494 = vadd.f32 %v479, %v487
  %v495 = vadd.f32 %v480, %v491
  %v498 = vcombine.low %v494, %v495
  %v500 = vunpack.c.l.s4 1983009808
  %v501 = vunpack.c.0.s8 %v500
  %v502 = vlaneseq
  %v503 = vshrl.u32 %v502, 7
  %v504 = vsub.s32 %v501, %v503
  %v505 = vrot.slane %v498, %v504
  %507 = vst [vmem:[%s5] sm:$0xf] %v505
  // Predicated region
  $region22: #{decoder_embedding.1} parent=0 // pred_check
    _
  $region23: #{decoder_embedding.1} parent=0 // pred_check_branch
    %509 = sbr.rel (0) target = $region25
  $region24: #{decoder_embedding.1} parent=0 // pred_region
    _
  $region25: #{decoder_embedding.1} parent=0 // pred_fallthru
    _
  // Predicated region
  $region26: #{decoder_embedding.1} parent=0 // pred_check
    _
  $region27: #{decoder_embedding.1} parent=0 // pred_check_branch
    %511 = sbr.rel (0) target = $region29
  $region28: #{decoder_embedding.1} parent=0 // pred_region
    _
  $region29: #{decoder_embedding.1} parent=0 // pred_fallthru
    _

</llo_original>
